<compile_context>
chip_gen: v5e
topology: v5e:2x2
jax: 0.10.0
libtpu: 0.0.40
codegen_flags: <defaults>
</compile_context>

<pallas_src>
import math

import jax
import jax.numpy as jnp
from jax.experimental import pallas as pl
from jax.experimental.pallas import tpu as pltpu

_LANE = 128


def _cdiv(a, b):
    return -(-a // b)


def _round_up(a, b):
    return _cdiv(a, b) * b


def _sublane(dtype) -> int:
    # packed sublane granularity: f32 -> 8, bf16/f16 -> 16, int8/fp8 -> 32
    return 8 * max(1, 4 // jnp.dtype(dtype).itemsize)


def _hw_params():
    """Generation-aware (block_bytes, vmem_limit_bytes, multi_core)."""
    vmem_cap = None
    try:
        vmem_cap = int(pltpu.get_tpu_info().vmem_capacity_bytes)
    except Exception:
        vmem_cap = None
    if vmem_cap is None or vmem_cap <= 96 * 1024 * 1024:
        # v7x-like: 64 MiB VMEM per TensorCore, 2 TCs/chip, 3.2 TB/s HBM.
        # 4 MiB blocks -> in+out double-buffered = 16 MiB (+ scale) << 44 MiB.
        return 4 * 1024 * 1024, 44 * 1024 * 1024, True
    # v5e / v6e: 128 MiB physical VMEM, single TensorCore.  The explicit limit
    # is required on v5e whose scoped default is only 16 MiB.
    return 6 * 1024 * 1024, 64 * 1024 * 1024, False


_BLOCK_BYTES, _VMEM_LIMIT, _MULTI_CORE = _hw_params()


def _layer_scale_kernel(s_ref, x_ref, o_ref):
    # Broadcast multiply at the (promoted) output precision.
    o_ref[...] = x_ref[...].astype(o_ref.dtype) * s_ref[...]


def _run(x2d, s_arr, rb, lb, s_block, s_index_map, out_dtype):
    """Tiled out = x2d * broadcast(s_arr) over a 2-D (rows, lanes) grid."""
    rows, lanes = x2d.shape
    grid = (_cdiv(rows, rb), _cdiv(lanes, lb))
    bytes_accessed = (rows * lanes * (x2d.dtype.itemsize + jnp.dtype(out_dtype).itemsize)
                      + s_arr.size * s_arr.dtype.itemsize)
    cost = pl.CostEstimate(flops=rows * lanes, transcendentals=0,
                           bytes_accessed=bytes_accessed)
    return pl.pallas_call(
        _layer_scale_kernel,
        out_shape=jax.ShapeDtypeStruct((rows, lanes), out_dtype),
        grid_spec=pltpu.PrefetchScalarGridSpec(
            num_scalar_prefetch=0,
            grid=grid,
            in_specs=[
                pl.BlockSpec(s_block, s_index_map),
                pl.BlockSpec((rb, lb), lambda r, c: (r, c)),
            ],
            out_specs=pl.BlockSpec((rb, lb), lambda r, c: (r, c)),
        ),
        compiler_params=pltpu.CompilerParams(
            dimension_semantics=("parallel", "parallel"),
            vmem_limit_bytes=_VMEM_LIMIT,
        ),
        cost_estimate=cost,
    )(s_arr, x2d)


def _ensure_multicore_steps(rows, lanes, rb, lb, row_unit, lane_unit, itemsize):
    """On dual-TC chips, make sure medium/large tensors give >= 2 grid steps
    along a parallel axis so both TensorCores are used."""
    if not _MULTI_CORE:
        return rb, lb
    if _cdiv(rows, rb) * _cdiv(lanes, lb) >= 2:
        return rb, lb
    if rows * lanes * itemsize < 2 * 1024 * 1024:   # too small to be worth per-step cost
        return rb, lb
    if rows > row_unit:                             # prefer splitting rows (keeps lane density)
        return _round_up(_cdiv(rows, 2), row_unit), lb
    if lane_unit is not None and lanes > lane_unit:
        new_lb = _round_up(_cdiv(lanes, 2), lane_unit)
        if new_lb < lanes:
            return rb, new_lb
    return rb, lb


def _scale_lastdim(x2d, s_vec, period, out_dtype):
    """out[r, l] = x2d[r, l] * s_vec[l % period].  Requires lanes % period == 0.
    Returns None if no lane-dense tiling exists (caller falls back)."""
    rows, lanes = x2d.shape
    itemsize = max(jnp.dtype(x2d.dtype).itemsize, jnp.dtype(out_dtype).itemsize)
    sub = max(_sublane(x2d.dtype), _sublane(out_dtype))

    # Lane target derived from the block budget and the *actual* row count, so
    # small-batch inputs (rows = 2..8) still get ~full-size blocks.
    assumed_rows = min(_round_up(rows, sub), 64)
    lane_target = max(_LANE, _BLOCK_BYTES // (itemsize * assumed_rows))
    unit = (period * _LANE) // math.gcd(period, _LANE)   # lcm(period, 128)

    if lanes <= lane_target:
        lb = lanes                         # full lane extent: always legal
    elif unit <= lane_target:
        lb = (lane_target // unit) * unit  # lane-dense, multiple of period and 128
    else:
        return None                        # pathological lcm -> caller falls back

    rb_cap = max(sub, (_BLOCK_BYTES // (itemsize * lb) // sub) * sub)
    rb = rows if rows <= rb_cap else rb_cap

    rb, lb = _ensure_multicore_steps(rows, lanes, rb, lb, sub, unit, itemsize)

    # Pre-tiled scale covers exactly one lane block; the pattern repeats because
    # period | lb, and every lane-block start is a multiple of lb (hence of period).
    s2d = jnp.tile(s_vec, lb // period).reshape(1, lb)
    return _run(x2d, s2d, rb, lb, (1, lb), lambda r, c: (0, 0), out_dtype)


def _scale_lastdim_fallback(x_flat, s_vec, period, out_dtype):
    """Lane-sparse but always-correct fallback: one scale period per row."""
    x2d = x_flat.reshape(-1, period)
    rows = x2d.shape[0]
    itemsize = max(jnp.dtype(x2d.dtype).itemsize, jnp.dtype(out_dtype).itemsize)
    sub = max(_sublane(x2d.dtype), _sublane(out_dtype))
    rb_cap = max(sub, (_BLOCK_BYTES // (itemsize * period) // sub) * sub)
    rb = rows if rows <= rb_cap else rb_cap
    rb, _ = _ensure_multicore_steps(rows, period, rb, period, sub, None, itemsize)
    s2d = s_vec.reshape(1, period)
    return _run(x2d, s2d, rb, period, (1, period), lambda r, c: (0, 0), out_dtype)


def layer_scale(x, scale, *, channel_last=False):
    """Apply demucs LayerScale with a Pallas TPU kernel.

    channel_last=False: x is (..., C, T), out = scale[:, None] * x
    channel_last=True : x is (..., C),    out = scale * x
    """
    C = scale.shape[0]
    out_dtype = jnp.result_type(x.dtype, scale.dtype)   # PyTorch-style promotion
    scale = scale.astype(out_dtype)
    orig_shape = x.shape

    if channel_last:
        assert x.shape[-1] == C, "channel_last expects trailing channel dim == channels"
        if C >= _LANE:
            # (N, C) layout: fully contiguous DMA, lane-dense, many sublane-dense rows.
            x2d = x.reshape(-1, C)
        else:
            # Small C: flatten trailing dims into the lane axis so stores stay lane-dense.
            x2d = x.reshape(1, C) if x.ndim == 1 else x.reshape(x.shape[0], -1)
        out2d = _scale_lastdim(x2d, scale, C, out_dtype)
        if out2d is None:
            out2d = _scale_lastdim_fallback(x.reshape(-1), scale, C, out_dtype)
        return out2d.reshape(orig_shape)

    # channel-first: x is (..., C, T), out = scale[:, None] * x
    assert x.ndim >= 2 and x.shape[-2] == C, "channel-first expects (..., C, T)"
    T = x.shape[-1]
    lead = 1
    for d in x.shape[:-2]:
        lead *= d

    if T < _LANE:
        # Lane-dense path for narrow T: flatten (C, T) into lanes, scale period C*T.
        x2d = x.reshape(lead, C * T)
        s_vec = jnp.repeat(scale, T)
        out2d = _scale_lastdim(x2d, s_vec, C * T, out_dtype)
        if out2d is None:
            out2d = _scale_lastdim_fallback(x.reshape(-1), s_vec, C * T, out_dtype)
        return out2d.reshape(orig_shape)

    # Main channel-first path: rows = lead*C, per-row scale.
    rows = lead * C
    x2d = x.reshape(rows, T)
    itemsize = max(jnp.dtype(x.dtype).itemsize, jnp.dtype(out_dtype).itemsize)
    sub = max(_sublane(x.dtype), _sublane(out_dtype))

    assumed_rows = min(_round_up(rows, sub), 64)
    lane_target = max(_LANE, _BLOCK_BYTES // (itemsize * assumed_rows))
    lb = T if T <= lane_target else max(_LANE, (lane_target // _LANE) * _LANE)

    # The (rb, 1) scale block is lane-padded to 128 lanes in VMEM: budget it.
    rb_cap = _BLOCK_BYTES // (itemsize * (lb + _LANE))
    row_unit = (C * sub) // math.gcd(C, sub)            # lcm(C, sublane)

    if row_unit <= rb_cap:
        # Constant scale block: rb is a multiple of C, so every row block starts at
        # channel 0 and a single pre-tiled (rb, 1) scale block (index_map (0,0)) is
        # reused for the whole grid - no per-row-block scale re-DMA.
        rb = max(row_unit, (rb_cap // row_unit) * row_unit)
        rb = min(rb, rows)                               # rows = lead*C is a multiple of C
        rb, lb = _ensure_multicore_steps(rows, T, rb, lb, row_unit, _LANE, itemsize)
        s_arr = jnp.tile(scale, rb // C).reshape(rb, 1)
        out2d = _run(x2d, s_arr, rb, lb, (rb, 1), lambda r, c: (0, 0), out_dtype)
    else:
        # C too large for a multiple-of-C row block: per-row-block scale (tiny DMA,
        # only on row-block changes; correctness unchanged).
        rb_cap = max(sub, (rb_cap // sub) * sub)
        rb = rows if rows <= rb_cap else rb_cap
        rb, lb = _ensure_multicore_steps(rows, T, rb, lb, sub, _LANE, itemsize)
        s_arr = (jnp.tile(scale, lead) if lead > 1 else scale).reshape(rows, 1)
        out2d = _run(x2d, s_arr, rb, lb, (rb, 1), lambda r, c: (r, 0), out_dtype)
    return out2d.reshape(orig_shape)


class LayerScale:
    """JAX/Pallas port of demucs LayerScale (forward only)."""

    def __init__(self, channels: int, init: float = 0.0, channel_last: bool = False):
        self.channel_last = channel_last
        # nn.Parameter(torch.zeros(channels)); self.scale.data[:] = init
        self.scale = jnp.full((channels,), init, dtype=jnp.float32)

    def __call__(self, x):
        return layer_scale(x, self.scale, channel_last=self.channel_last)


if __name__ == "__main__":
    key = jax.random.PRNGKey(0)
    init_val = 0.5
    ks = jax.random.split(key, 6)

    # 1) channel-first (demucs default), T >= 128 path
    B, C, T = 2, 8, 256
    mod_cf = LayerScale(C, init=init_val, channel_last=False)
    x = jax.random.normal(ks[0], (B, C, T), dtype=jnp.float32)
    out = jax.block_until_ready(mod_cf(x))
    ref = mod_cf.scale[:, None] * x
    assert out.shape == x.shape and out.dtype == ref.dtype
    assert jnp.allclose(out, ref, atol=1e-6, rtol=1e-6)

    # 2) channel-first, ragged T (not a multiple of 128) -> masked edge lane tiles
    x = jax.random.normal(ks[1], (B, C, 200), dtype=jnp.float32)
    out = jax.block_until_ready(mod_cf(x))
    assert jnp.allclose(out, mod_cf.scale[:, None] * x, atol=1e-6, rtol=1e-6)

    # 3) channel-first, T < 128 -> lane-dense flattened (C*T) path
    x = jax.random.normal(ks[2], (B, C, 64), dtype=jnp.float32)
    out = jax.block_until_ready(mod_cf(x))
    assert jnp.allclose(out, mod_cf.scale[:, None] * x, atol=1e-6, rtol=1e-6)

    # 4) channel-last, small C (< 128) -> lane-flattened path
    mod_cl = LayerScale(C, init=init_val, channel_last=True)
    x = jax.random.normal(ks[3], (B, 256, C), dtype=jnp.float32)
    out = jax.block_until_ready(mod_cl(x))
    assert jnp.allclose(out, mod_cl.scale * x, atol=1e-6, rtol=1e-6)

    # 5) channel-last, C >= 128 -> (N, C) lane-dense path (demucs transformer regime)
    C2 = 128
    mod_cl2 = LayerScale(C2, init=init_val, channel_last=True)
    x = jax.random.normal(ks[4], (B, 16, C2), dtype=jnp.float32)
    out = jax.block_until_ready(mod_cl2(x))
    assert jnp.allclose(out, mod_cl2.scale * x, atol=1e-6, rtol=1e-6)

    # 6) dtype promotion: bf16 activations * f32 scale -> f32 output (PyTorch semantics)
    x = jax.random.normal(ks[5], (B, 16, C2), dtype=jnp.bfloat16)
    out = jax.block_until_ready(mod_cl2(x))
    ref = mod_cl2.scale * x
    assert out.dtype == ref.dtype == jnp.float32
    assert jnp.allclose(out, ref, atol=1e-5, rtol=1e-5)

    print("KERNEL_OK")
</pallas_src>

<mosaic_0001>
module attributes {stable_mosaic.version = 11 : i64} {
  func.func @_layer_scale_kernel(%arg0: i32, %arg1: i32, %arg2: memref<16x1xf32, #tpu.memory_space<vmem>>, %arg3: memref<16x256xf32, #tpu.memory_space<vmem>>, %arg4: memref<16x256xf32, #tpu.memory_space<vmem>>) attributes {dimension_semantics = [#tpu.dimension_semantics<parallel>, #tpu.dimension_semantics<parallel>], iteration_bounds = array<i64: 1, 1>, scalar_prefetch = 0 : i64, scratch_operands = 0 : i64, tpu.core_type = #tpu.core_type<tc>, window_params = [{pipeline_mode = #tpu.pipeline_mode<synchronous>, transform_indices = @transform_0, window_bounds = array<i64: 16, 1>}, {transform_indices = @transform_1, window_bounds = array<i64: 16, 256>}, {transform_indices = @transform_2, window_bounds = array<i64: 16, 256>}]} {
    %c0 = arith.constant 0 : index
    %c0_0 = arith.constant 0 : index
    %0 = vector.load %arg3[%c0, %c0_0] : memref<16x256xf32, #tpu.memory_space<vmem>>, vector<16x256xf32>
    %c0_1 = arith.constant 0 : index
    %c0_2 = arith.constant 0 : index
    %1 = vector.load %arg2[%c0_1, %c0_2] : memref<16x1xf32, #tpu.memory_space<vmem>>, vector<16x1xf32>
    %2 = vector.broadcast %1 : vector<16x1xf32> to vector<16x256xf32>
    %3 = arith.mulf %0, %2 : vector<16x256xf32>
    %c0_3 = arith.constant 0 : index
    %c0_4 = arith.constant 0 : index
    %4 = vector.load %arg4[%c0_3, %c0_4] : memref<16x256xf32, #tpu.memory_space<vmem>>, vector<16x256xf32>
    tpu.vector_store %arg4[%c0_3, %c0_4], %3 {strides = array<i32>} : memref<16x256xf32, #tpu.memory_space<vmem>>, vector<16x256xf32>,
    return
  }
  func.func @transform_0(%arg0: i32, %arg1: i32) -> (i32, i32) {
    %c0_i32 = arith.constant 0 : i32
    %c0_i32_0 = arith.constant 0 : i32
    %c0_i32_1 = arith.constant 0 : i32
    return %c0_i32, %c0_i32_0 : i32, i32
  }
  func.func @transform_1(%arg0: i32, %arg1: i32) -> (i32, i32) {
    %c0_i32 = arith.constant 0 : i32
    return %arg0, %arg1 : i32, i32
  }
  func.func @transform_2(%arg0: i32, %arg1: i32) -> (i32, i32) {
    %c0_i32 = arith.constant 0 : i32
    return %arg0, %arg1 : i32, i32
  }
}

</mosaic_0001>

<llo_original>
// kernel: tpu_custom_call.1
$region0: #{tpu_custom_call.1}
  #allocation0 [shape = 'u32[]', space=smem, size = 0x4, offset = 0x4, fixed_abs, tag = 'smem constant byte address 0x4 - core index']
  #allocation1 [shape = 'u32[72,128]{1,0:T(1,128)}', space=vmem, size = 0x9000, scoped, tag = 'internal scratch']
  %s0 = inlined_call_operand.vmem [shape: f32[16,1], index: 0, kind: input, shape index: {}]
  %s1 = inlined_call_operand.hbm [shape: f32[16,256], index: 1, kind: input, shape index: {}]
  %s2 = inlined_call_operand.hbm [shape: f32[16,256], index: 2, kind: output, shape index: {}]
  %s3 = sld [smem:[#allocation0]]
  $region22: #{tpu_custom_call.1} parent=0
    _
  %s5 = ssub.s32 1, %s3
  %s6 = scalar_select 0, %s5, %s3
  $region1: #{tpu_custom_call.1} parent=0
    #allocation2 [shape = 'u8[16384]{0}', space=vmem, size = 0x4000, scoped, tag = 'input window, operand 1, single buffered']
    #allocation3 [shape = 's32[1]{0}', space=sflag, size = 0x4, scoped, tag = 'scoped memory for tpu_custom_call.1']
    #allocation4 [shape = 's32[1]{0}', space=sflag, size = 0x4, scoped, tag = 'scoped memory for tpu_custom_call.1']
    #allocation5 [shape = 'u8[16384]{0}', space=vmem, size = 0x4000, scoped, tag = 'output window, operand 0, single buffered']
    %7 = vsyncpa [#allocation3], 0
    %8 = vsyncpa [#allocation4], 0
    // Predicated region
    $region2: #{tpu_custom_call.1} parent=1 // pred_check
      _
    $region3: #{tpu_custom_call.1} parent=1 // pred_check_branch
      %10 = sbr.rel (0) target = $region5
    $region4: #{tpu_custom_call.1} parent=1 // pred_region
      _
    $region5: #{tpu_custom_call.1} parent=1 // pred_fallthru
      _
    // Predicated region
    $region6: #{tpu_custom_call.1} parent=1 // pred_check
      _
    $region7: #{tpu_custom_call.1} parent=1 // pred_check_branch
      %12 = sbr.rel (0) target = $region9
    $region8: #{tpu_custom_call.1} parent=1 // pred_region
      %14 = vsyncadd [#allocation3], 0
      %s15 = sshll.u32 %s1, 4
      %s16 = int_to_ptr.hbm [resolvable:$true] %s15
      %s17 = sshll.u32 [#allocation2], 4
      %s18 = int_to_ptr.vmem [resolvable:$true] %s17
      %23 = dma.hbm_to_vmem [thread:$0]  %s16, 512, %s18, [#allocation3], 256, 256, 16
    $region9: #{tpu_custom_call.1} parent=1 // pred_fallthru
      _
    // Predicated region
    $region10: #{tpu_custom_call.1} parent=1 // pred_check
      _
    $region11: #{tpu_custom_call.1} parent=1 // pred_check_branch
      %25 = sbr.rel (0) target = $region13
    $region12: #{tpu_custom_call.1} parent=1 // pred_region
      %27 = dma.done [#allocation3], 512
    $region13: #{tpu_custom_call.1} parent=1 // pred_fallthru
      _
    %v28 = vld [vmem:[#allocation2] sm:$0xff]
    %v29 = vld [vmem:[#allocation2 + $0x8] sm:$0xff]
    %v30 = vld [vmem:[#allocation2 + $0x10] sm:$0xff]
    %v31 = vld [vmem:[#allocation2 + $0x18] sm:$0xff]
    %v32 = vld [vmem:[%s0] sm:$0xff]
    %v33 = vld [vmem:[%s0 + $0x8] sm:$0xff]
    %35 = vset.pattern.permute.xlu0 0
    %36 = vperm.xlu0 %35, %v32
    %v37 = vpop.permute.xlu0 %36
    %40 = vset.pattern.permute.xlu0 0
    %41 = vperm.xlu0 %40, %v33
    %v42 = vpop.permute.xlu0 %41
    %v44 = vmul.f32 %v28, %v37
    %v45 = vmul.f32 %v29, %v37
    %v46 = vmul.f32 %v30, %v42
    %v47 = vmul.f32 %v31, %v42
    %48 = vst [vmem:[#allocation5] sm:$0xff] %v44
    %49 = vst [vmem:[#allocation5 + $0x8] sm:$0xff] %v45
    %50 = vst [vmem:[#allocation5 + $0x10] sm:$0xff] %v46
    %51 = vst [vmem:[#allocation5 + $0x18] sm:$0xff] %v47
    // Predicated region
    $region14: #{tpu_custom_call.1} parent=1 // pred_check
      _
    $region15: #{tpu_custom_call.1} parent=1 // pred_check_branch
      %53 = sbr.rel (0) target = $region17
    $region16: #{tpu_custom_call.1} parent=1 // pred_region
      %55 = vsyncadd [#allocation4], 0
      %s56 = sshll.u32 [#allocation5], 4
      %s57 = int_to_ptr.vmem [resolvable:$true] %s56
      %s58 = sshll.u32 %s2, 4
      %s59 = int_to_ptr.hbm [resolvable:$true] %s58
      %64 = dma.vmem_to_hbm [thread:$0]  %s57, 512, %s59, [#allocation4], 256, 256, 16
    $region17: #{tpu_custom_call.1} parent=1 // pred_fallthru
      _
    // Predicated region
    $region18: #{tpu_custom_call.1} parent=1 // pred_check
      _
    $region19: #{tpu_custom_call.1} parent=1 // pred_check_branch
      %66 = sbr.rel (0) target = $region21
    $region20: #{tpu_custom_call.1} parent=1 // pred_region
      %68 = dma.done [#allocation4], 512
    $region21: #{tpu_custom_call.1} parent=1 // pred_fallthru
      _
    %69 = vsyncpa [#allocation3], 1
    %70 = vsyncpa [#allocation4], 1

</llo_original>
